<compile_context>
chip_gen: v6e
topology: v6e:2x2x1
jax: 0.10.0
libtpu: 0.0.40
codegen_flags: <defaults>
</compile_context>

<pallas_src>
import functools

import jax
import jax.numpy as jnp
from jax import lax
from jax.experimental import pallas as pl
from jax.experimental.pallas import tpu as pltpu


# ---------------------------------------------------------------------------
# batched matmul helpers (no explicit transposes on VMEM tiles)
# ---------------------------------------------------------------------------
def _bmm(p, q):
    """(BB, D, D) @ (BB, D, D) on the MXU, f32 accumulate."""
    return lax.dot_general(
        p, q,
        dimension_numbers=(((2,), (1,)), ((0,), (0,))),
        preferred_element_type=jnp.float32)


def _vpu_mv(m, v):
    """(BB, D, D) @ (BB, D) on the VPU (broadcast-mul + lane reduce), exact f32."""
    return jnp.sum(m * v[:, None, :], axis=2)


def _normalize(v):
    n = jnp.sqrt(jnp.sum(v * v, axis=1, keepdims=True))
    return v / jnp.maximum(n, 1e-30)


# ---------------------------------------------------------------------------
# Kernel 1: per batch block  S = A^T A, aty = A^T y, lam = lambda_max(S)
# ---------------------------------------------------------------------------
def _gram_kernel(a_ref, y_ref, s_ref, aty_ref, lam_ref, *, power_iters):
    a = a_ref[...]                                   # (BB, N, D)
    yv = y_ref[...]                                  # (BB, N)

    # S_b = A_b^T A_b : contract N on the MXU.
    s = lax.dot_general(
        a, a,
        dimension_numbers=(((1,), (1,)), ((0,), (0,))),
        preferred_element_type=jnp.float32)          # (BB, D, D)
    s_ref[...] = s

    # aty_b = A_b^T y_b on the VPU (avoids a batched mat-vec on the MXU).
    aty_ref[...] = jnp.sum(
        a.astype(jnp.float32) * yv.astype(jnp.float32)[..., None], axis=1)

    # ---- in-kernel lambda_max(S) estimate (replaces XLA eigvalsh) ----------
    # inf-norm row-sum bound: bound >= lambda_max >= bound / D  (S symmetric PSD)
    bound = jnp.max(jnp.sum(jnp.abs(s), axis=2), axis=1)            # (BB,)
    safe = jnp.maximum(bound, 1e-30)
    t = s / safe[:, None, None]                      # spectrum of t in (0, 1]

    # gap amplification: t8 = t^8 (3 cheap batched MXU matmuls)
    t2 = _bmm(t, t)
    t4 = _bmm(t2, t2)
    t8 = _bmm(t4, t4)

    # power iteration on t8 (VPU matvecs, exact f32)
    def power_body(_, v):
        return _normalize(_vpu_mv(t8, v))
    v = lax.fori_loop(0, power_iters, power_body,
                      jnp.ones((t8.shape[0], t8.shape[1]), jnp.float32))

    # polish on the un-amplified t, then an exact-VPU Rayleigh readout:
    # the estimate is first-order insensitive to eigenvector error.
    def polish_body(_, v):
        return _normalize(_vpu_mv(t, v))
    v = lax.fori_loop(0, 4, polish_body, v)
    tv = _vpu_mv(t, v)
    rq = jnp.sum(v * tv, axis=1) / jnp.maximum(jnp.sum(v * v, axis=1), 1e-30)
    lam_ref[...] = (safe * jnp.maximum(rq, 0.0))[:, None]           # (BB, 1)


# ---------------------------------------------------------------------------
# Kernel 2: per batch block Newton–Schulz iterations + solve w = X @ (A^T y)
# ---------------------------------------------------------------------------
def _newton_kernel(alpha_ref, s_ref, aty_ref, w_ref, *, num_iterations):
    s = s_ref[...]                                   # (BB, D, D) f32
    aty = aty_ref[...]                               # (BB, D)    f32
    alpha = alpha_ref[0]                             # scalar (SMEM, scalar-prefetched)

    def newton_body(_, x):
        return 2.0 * x - _bmm(_bmm(x, s), x)

    # fori_loop bounds the live set to one iteration (no unrolled vreg blow-up).
    x = lax.fori_loop(0, num_iterations, newton_body, alpha * s)

    # w_b = X_b @ aty_b on the VPU (D is tiny vs the MXU tile).
    w_ref[...] = jnp.sum(x * aty[:, None, :], axis=2)


# ---------------------------------------------------------------------------
# BB (batches per grid step) heuristic
# ---------------------------------------------------------------------------
def _choose_block_b(B, N, D, itemsize):
    if B <= 8:
        return B                                     # full extent, always legal
    a_bytes = N * D * itemsize
    # ~2 MiB of A per step amortizes the ~0.35 us/step pipeline overhead.
    bb_target = max(1, (2 << 20) // max(a_bytes, 1))
    # Keep double-buffered windows + in-kernel f32 temporaries well under the
    # v5e 16 MiB scoped-VMEM default (also safe for v7x's 32 MiB / 64 MiB).
    per_b_vmem = (2 * a_bytes + 3 * N * D * 4 + 2 * N * itemsize
                  + 8 * D * D * 4 + 16 * D * 4 + 64)
    bb_cap = max(1, (10 << 20) // per_b_vmem)
    bb = min(bb_target, bb_cap)
    if bb >= B:
        # keep >=2 grid steps where possible so both v7x TensorCores get work
        if B >= 16:
            return max(8, (((B + 1) // 2) // 8) * 8)
        return B
    bb = max(8, (bb // 8) * 8)                       # (8,128) rule on (BB, *) blocks
    return B if bb >= B else bb


# ---------------------------------------------------------------------------
# Wrapper
# ---------------------------------------------------------------------------
def iterated_newton_forward(A, y, num_iterations, *, power_iters=32,
                            compute_dtype=jnp.float32, block_b=None):
    """Pallas implementation of IteratedNewtonModel.forward (fresh state)."""
    A = jnp.asarray(A, dtype=compute_dtype)
    y = jnp.asarray(y, dtype=compute_dtype)
    B, N, D = A.shape
    itemsize = jnp.dtype(compute_dtype).itemsize

    BB = block_b if block_b is not None else _choose_block_b(B, N, D, itemsize)
    if BB >= B:
        BB = B
    elif BB % 8:
        BB = max(8, (BB // 8) * 8)                   # keep block dims legal
        BB = min(BB, B)
    Bp = ((B + BB - 1) // BB) * BB
    if Bp != B:
        A = jnp.pad(A, ((0, Bp - B), (0, 0), (0, 0)))
        y = jnp.pad(y, ((0, Bp - B), (0, 0)))
    grid = (Bp // BB,)

    k1_cost = pl.CostEstimate(
        flops=int(Bp * (2 * N * D * D + 2 * N * D + 6 * D * D * D
                        + 2 * (power_iters + 8) * D * D)),
        transcendentals=0,
        bytes_accessed=int(Bp * (N * D + N) * itemsize + Bp * (D * D + D + 1) * 4),
    )
    k2_cost = pl.CostEstimate(
        flops=int(Bp * (num_iterations * 4 * D * D * D + 3 * D * D)),
        transcendentals=0,
        bytes_accessed=int(Bp * (D * D + 2 * D) * 4 + 4),
    )

    # --- Kernel 1: S, aty and lambda_max(S) in a single pass over A ---------
    S, aty, lam = pl.pallas_call(
        functools.partial(_gram_kernel, power_iters=power_iters),
        out_shape=(
            jax.ShapeDtypeStruct((Bp, D, D), jnp.float32),
            jax.ShapeDtypeStruct((Bp, D), jnp.float32),
            jax.ShapeDtypeStruct((Bp, 1), jnp.float32),
        ),
        grid_spec=pltpu.PrefetchScalarGridSpec(
            num_scalar_prefetch=0,
            grid=grid,
            in_specs=[
                pl.BlockSpec((BB, N, D), lambda b: (b, 0, 0)),
                pl.BlockSpec((BB, N), lambda b: (b, 0)),
            ],
            out_specs=(
                pl.BlockSpec((BB, D, D), lambda b: (b, 0, 0)),
                pl.BlockSpec((BB, D), lambda b: (b, 0)),
                pl.BlockSpec((BB, 1), lambda b: (b, 0)),
            ),
        ),
        compiler_params=pltpu.CompilerParams(dimension_semantics=("parallel",)),
        cost_estimate=k1_cost,
    )(A, y)

    # --- initialize(): alpha = 2 / lambda_max(S S^T) = 2 / (max_b lam_b)^2 ---
    lam_max = jnp.max(lam[:B, 0])                    # trivial B-length reduce in XLA
    alpha = (2.0 / (lam_max * lam_max)).reshape(1).astype(jnp.float32)

    # --- Kernel 2: Newton–Schulz iterations + solve ---------------------------
    w = pl.pallas_call(
        functools.partial(_newton_kernel, num_iterations=num_iterations),
        out_shape=jax.ShapeDtypeStruct((Bp, D), jnp.float32),
        grid_spec=pltpu.PrefetchScalarGridSpec(
            num_scalar_prefetch=1,                   # alpha -> SMEM
            grid=grid,
            in_specs=[
                pl.BlockSpec((BB, D, D), lambda b, alpha_ref: (b, 0, 0)),
                pl.BlockSpec((BB, D), lambda b, alpha_ref: (b, 0)),
            ],
            out_specs=pl.BlockSpec((BB, D), lambda b, alpha_ref: (b, 0)),
        ),
        compiler_params=pltpu.CompilerParams(dimension_semantics=("parallel",)),
        cost_estimate=k2_cost,
    )(alpha, S, aty)
    return w[:B]


# ---------------------------------------------------------------------------
# Pure-JAX reference (mirrors the torch module line by line)
# ---------------------------------------------------------------------------
def reference_forward(A, y, num_iterations):
    S = jnp.matmul(jnp.swapaxes(A, 1, 2), A)
    SS_T = jnp.matmul(S, jnp.swapaxes(S, 1, 2))
    lambda_max = jnp.max(jnp.linalg.eigvalsh(SS_T))
    X = (2.0 / lambda_max) * S
    for _ in range(num_iterations):
        X = 2.0 * X - jnp.matmul(jnp.matmul(X, S), X)
    w = jnp.matmul(X, jnp.matmul(jnp.swapaxes(A, 1, 2), y[..., None]))
    return w[..., 0]


if __name__ == "__main__":
    B, N, D = 2, 16, 8          # batch, samples-per-batch, input_dim
    num_iterations = 5

    key = jax.random.PRNGKey(0)
    kA, ky = jax.random.split(key)
    A = jax.random.normal(kA, (B, N, D), dtype=jnp.float32)
    y = jax.random.normal(ky, (B, N), dtype=jnp.float32)

    w = jax.block_until_ready(iterated_newton_forward(A, y, num_iterations))
    w_ref = reference_forward(A, y, num_iterations)

    assert w.shape == (B, D)
    # lambda_max comes from an in-kernel spectral estimate instead of eigvalsh;
    # it is accurate to ~1e-6 relative, so the iterate trajectory matches closely.
    assert jnp.allclose(w, w_ref, rtol=2e-3, atol=2e-3), (w, w_ref)

    print("KERNEL_OK")
</pallas_src>

<mosaic_0001>
module attributes {stable_mosaic.version = 11 : i64} {
  func.func @_gram_kernel(%arg0: i32, %arg1: memref<2x16x8xf32, #tpu.memory_space<vmem>>, %arg2: memref<2x16xf32, #tpu.memory_space<vmem>>, %arg3: memref<2x8x8xf32, #tpu.memory_space<vmem>>, %arg4: memref<2x8xf32, #tpu.memory_space<vmem>>, %arg5: memref<2x1xf32, #tpu.memory_space<vmem>>) attributes {dimension_semantics = [#tpu.dimension_semantics<parallel>], iteration_bounds = array<i64: 1>, scalar_prefetch = 0 : i64, scratch_operands = 0 : i64, tpu.core_type = #tpu.core_type<tc>, window_params = [{transform_indices = @transform_0, window_bounds = array<i64: 2, 16, 8>}, {transform_indices = @transform_1, window_bounds = array<i64: 2, 16>}, {transform_indices = @transform_2, window_bounds = array<i64: 2, 8, 8>}, {transform_indices = @transform_3, window_bounds = array<i64: 2, 8>}, {transform_indices = @transform_4, window_bounds = array<i64: 2, 1>}]} {
    %c0 = arith.constant 0 : index
    %c0_0 = arith.constant 0 : index
    %c0_1 = arith.constant 0 : index
    %0 = vector.load %arg1[%c0, %c0_0, %c0_1] : memref<2x16x8xf32, #tpu.memory_space<vmem>>, vector<2x16x8xf32>
    %c0_2 = arith.constant 0 : index
    %c0_3 = arith.constant 0 : index
    %1 = vector.load %arg2[%c0_2, %c0_3] : memref<2x16xf32, #tpu.memory_space<vmem>>, vector<2x16xf32>
    %cst = arith.constant dense<0.000000e+00> : vector<2x8x8xf32>
    %2 = tpu.matmul %0, %0, %cst {dimension_numbers = #tpu.dot_dimension_numbers<[1], [1], [2], [2], [0, 0, 0, 2, 1, 2], [0], [0]>} : vector<2x16x8xf32>, vector<2x16x8xf32>, vector<2x8x8xf32> -> vector<2x8x8xf32>
    %c0_4 = arith.constant 0 : index
    %c0_5 = arith.constant 0 : index
    %c0_6 = arith.constant 0 : index
    %3 = vector.load %arg3[%c0_4, %c0_5, %c0_6] : memref<2x8x8xf32, #tpu.memory_space<vmem>>, vector<2x8x8xf32>
    tpu.vector_store %arg3[%c0_4, %c0_5, %c0_6], %2 {strides = array<i32>} : memref<2x8x8xf32, #tpu.memory_space<vmem>>, vector<2x8x8xf32>,
    %4 = vector.shape_cast %1 : vector<2x16xf32> to vector<2x16x1xf32>
    %5 = vector.broadcast %4 : vector<2x16x1xf32> to vector<2x16x8xf32>
    %6 = arith.mulf %0, %5 : vector<2x16x8xf32>
    %cst_7 = arith.constant dense<0.000000e+00> : vector<2x8xf32>
    %7 = vector.multi_reduction <add>, %6, %cst_7 [1] : vector<2x16x8xf32> to vector<2x8xf32>
    %c0_8 = arith.constant 0 : index
    %c0_9 = arith.constant 0 : index
    %8 = vector.load %arg4[%c0_8, %c0_9] : memref<2x8xf32, #tpu.memory_space<vmem>>, vector<2x8xf32>
    tpu.vector_store %arg4[%c0_8, %c0_9], %7 {strides = array<i32>} : memref<2x8xf32, #tpu.memory_space<vmem>>, vector<2x8xf32>,
    %9 = math.absf %2 : vector<2x8x8xf32>
    %cst_10 = arith.constant dense<0.000000e+00> : vector<2x8xf32>
    %10 = vector.multi_reduction <add>, %9, %cst_10 [2] : vector<2x8x8xf32> to vector<2x8xf32>
    %cst_11 = arith.constant dense<0xFF800000> : vector<2xf32>
    %11 = vector.multi_reduction <maximumf>, %10, %cst_11 [1] : vector<2x8xf32> to vector<2xf32>
    %cst_12 = arith.constant 1.000000e-30 : f32
    %12 = vector.broadcast %cst_12 : f32 to vector<2xf32>
    %13 = arith.maximumf %11, %12 : vector<2xf32>
    %14 = vector.shape_cast %13 : vector<2xf32> to vector<2x1x1xf32>
    %15 = vector.broadcast %14 : vector<2x1x1xf32> to vector<2x8x8xf32>
    %16 = arith.divf %2, %15 : vector<2x8x8xf32>
    %cst_13 = arith.constant dense<0.000000e+00> : vector<2x8x8xf32>
    %17 = tpu.matmul %16, %16, %cst_13 {dimension_numbers = #tpu.dot_dimension_numbers<[2], [1], [1], [2], [0, 0, 0, 1, 1, 2], [0], [0]>} : vector<2x8x8xf32>, vector<2x8x8xf32>, vector<2x8x8xf32> -> vector<2x8x8xf32>
    %cst_14 = arith.constant dense<0.000000e+00> : vector<2x8x8xf32>
    %18 = tpu.matmul %17, %17, %cst_14 {dimension_numbers = #tpu.dot_dimension_numbers<[2], [1], [1], [2], [0, 0, 0, 1, 1, 2], [0], [0]>} : vector<2x8x8xf32>, vector<2x8x8xf32>, vector<2x8x8xf32> -> vector<2x8x8xf32>
    %cst_15 = arith.constant dense<0.000000e+00> : vector<2x8x8xf32>
    %19 = tpu.matmul %18, %18, %cst_15 {dimension_numbers = #tpu.dot_dimension_numbers<[2], [1], [1], [2], [0, 0, 0, 1, 1, 2], [0], [0]>} : vector<2x8x8xf32>, vector<2x8x8xf32>, vector<2x8x8xf32> -> vector<2x8x8xf32>
    %cst_16 = arith.constant 1.000000e+00 : f32
    %20 = vector.broadcast %cst_16 : f32 to vector<2x8xf32>
    %c0_i32 = arith.constant 0 : i32
    %c32_i32 = arith.constant 32 : i32
    %21 = arith.addi %c0_i32, %c32_i32 : i32
    %c1_i32 = arith.constant 1 : i32
    %22 = scf.for %arg6 = %c0_i32 to %21 step %c1_i32 iter_args(%arg7 = %20) -> (vector<2x8xf32>)  : i32 {
      %41 = vector.shape_cast %arg7 : vector<2x8xf32> to vector<2x1x8xf32>
      %42 = vector.broadcast %41 : vector<2x1x8xf32> to vector<2x8x8xf32>
      %43 = arith.mulf %19, %42 : vector<2x8x8xf32>
      %cst_26 = arith.constant dense<0.000000e+00> : vector<2x8xf32>
      %44 = vector.multi_reduction <add>, %43, %cst_26 [2] : vector<2x8x8xf32> to vector<2x8xf32>
      %45 = arith.mulf %44, %44 : vector<2x8xf32>
      %cst_27 = arith.constant dense<0.000000e+00> : vector<2xf32>
      %46 = vector.multi_reduction <add>, %45, %cst_27 [1] : vector<2x8xf32> to vector<2xf32>
      %47 = vector.shape_cast %46 : vector<2xf32> to vector<2x1xf32>
      %48 = math.sqrt %47 : vector<2x1xf32>
      %cst_28 = arith.constant 1.000000e-30 : f32
      %49 = vector.broadcast %cst_28 : f32 to vector<2x1xf32>
      %50 = arith.maximumf %48, %49 : vector<2x1xf32>
      %51 = vector.broadcast %50 : vector<2x1xf32> to vector<2x8xf32>
      %52 = arith.divf %44, %51 : vector<2x8xf32>
      scf.yield %52 : vector<2x8xf32>
    }
    %c0_i32_17 = arith.constant 0 : i32
    %c4_i32 = arith.constant 4 : i32
    %23 = arith.addi %c0_i32_17, %c4_i32 : i32
    %c1_i32_18 = arith.constant 1 : i32
    %24 = scf.for %arg6 = %c0_i32_17 to %23 step %c1_i32_18 iter_args(%arg7 = %22) -> (vector<2x8xf32>)  : i32 {
      %41 = vector.shape_cast %arg7 : vector<2x8xf32> to vector<2x1x8xf32>
      %42 = vector.broadcast %41 : vector<2x1x8xf32> to vector<2x8x8xf32>
      %43 = arith.mulf %16, %42 : vector<2x8x8xf32>
      %cst_26 = arith.constant dense<0.000000e+00> : vector<2x8xf32>
      %44 = vector.multi_reduction <add>, %43, %cst_26 [2] : vector<2x8x8xf32> to vector<2x8xf32>
      %45 = arith.mulf %44, %44 : vector<2x8xf32>
      %cst_27 = arith.constant dense<0.000000e+00> : vector<2xf32>
      %46 = vector.multi_reduction <add>, %45, %cst_27 [1] : vector<2x8xf32> to vector<2xf32>
      %47 = vector.shape_cast %46 : vector<2xf32> to vector<2x1xf32>
      %48 = math.sqrt %47 : vector<2x1xf32>
      %cst_28 = arith.constant 1.000000e-30 : f32
      %49 = vector.broadcast %cst_28 : f32 to vector<2x1xf32>
      %50 = arith.maximumf %48, %49 : vector<2x1xf32>
      %51 = vector.broadcast %50 : vector<2x1xf32> to vector<2x8xf32>
      %52 = arith.divf %44, %51 : vector<2x8xf32>
      scf.yield %52 : vector<2x8xf32>
    }
    %25 = vector.shape_cast %24 : vector<2x8xf32> to vector<2x1x8xf32>
    %26 = vector.broadcast %25 : vector<2x1x8xf32> to vector<2x8x8xf32>
    %27 = arith.mulf %16, %26 : vector<2x8x8xf32>
    %cst_19 = arith.constant dense<0.000000e+00> : vector<2x8xf32>
    %28 = vector.multi_reduction <add>, %27, %cst_19 [2] : vector<2x8x8xf32> to vector<2x8xf32>
    %29 = arith.mulf %24, %28 : vector<2x8xf32>
    %cst_20 = arith.constant dense<0.000000e+00> : vector<2xf32>
    %30 = vector.multi_reduction <add>, %29, %cst_20 [1] : vector<2x8xf32> to vector<2xf32>
    %31 = arith.mulf %24, %24 : vector<2x8xf32>
    %cst_21 = arith.constant dense<0.000000e+00> : vector<2xf32>
    %32 = vector.multi_reduction <add>, %31, %cst_21 [1] : vector<2x8xf32> to vector<2xf32>
    %cst_22 = arith.constant 1.000000e-30 : f32
    %33 = vector.broadcast %cst_22 : f32 to vector<2xf32>
    %34 = arith.maximumf %32, %33 : vector<2xf32>
    %35 = arith.divf %30, %34 : vector<2xf32>
    %cst_23 = arith.constant 0.000000e+00 : f32
    %36 = vector.broadcast %cst_23 : f32 to vector<2xf32>
    %37 = arith.maximumf %35, %36 : vector<2xf32>
    %38 = arith.mulf %13, %37 : vector<2xf32>
    %39 = vector.shape_cast %38 : vector<2xf32> to vector<2x1xf32>
    %c0_24 = arith.constant 0 : index
    %c0_25 = arith.constant 0 : index
    %40 = vector.load %arg5[%c0_24, %c0_25] : memref<2x1xf32, #tpu.memory_space<vmem>>, vector<2x1xf32>
    tpu.vector_store %arg5[%c0_24, %c0_25], %39 {strides = array<i32>} : memref<2x1xf32, #tpu.memory_space<vmem>>, vector<2x1xf32>,
    return
  }
  func.func @transform_0(%arg0: i32) -> (i32, i32, i32) {
    %c0_i32 = arith.constant 0 : i32
    %c0_i32_0 = arith.constant 0 : i32
    %c0_i32_1 = arith.constant 0 : i32
    return %arg0, %c0_i32, %c0_i32_0 : i32, i32, i32
  }
  func.func @transform_1(%arg0: i32) -> (i32, i32) {
    %c0_i32 = arith.constant 0 : i32
    %c0_i32_0 = arith.constant 0 : i32
    return %arg0, %c0_i32 : i32, i32
  }
  func.func @transform_2(%arg0: i32) -> (i32, i32, i32) {
    %c0_i32 = arith.constant 0 : i32
    %c0_i32_0 = arith.constant 0 : i32
    %c0_i32_1 = arith.constant 0 : i32
    return %arg0, %c0_i32, %c0_i32_0 : i32, i32, i32
  }
  func.func @transform_3(%arg0: i32) -> (i32, i32) {
    %c0_i32 = arith.constant 0 : i32
    %c0_i32_0 = arith.constant 0 : i32
    return %arg0, %c0_i32 : i32, i32
  }
  func.func @transform_4(%arg0: i32) -> (i32, i32) {
    %c0_i32 = arith.constant 0 : i32
    %c0_i32_0 = arith.constant 0 : i32
    return %arg0, %c0_i32 : i32, i32
  }
}

</mosaic_0001>

<llo_original>
// kernel: tpu_custom_call.1
$region0: #{tpu_custom_call.1}
  #allocation0 [shape = 'u32[]', space=smem, size = 0x4, offset = 0x4, fixed_abs, tag = 'smem constant byte address 0x4 - core index']
  #allocation1 [shape = 'u32[144,128]{1,0:T(1,128)}', space=vmem, size = 0x12000, scoped, tag = 'internal scratch']
  %s0 = inlined_call_operand.vmem [shape: f32[2,16,8], index: 0, kind: input, shape index: {}]
  %s1 = inlined_call_operand.vmem [shape: f32[2,16], index: 1, kind: input, shape index: {}]
  %s2 = inlined_call_operand.hbm [shape: f32[2,8,8], index: 2, kind: output, shape index: {0}]
  %s3 = inlined_call_operand.hbm [shape: f32[2,8], index: 3, kind: output, shape index: {1}]
  %s4 = inlined_call_operand.vmem [shape: f32[2,1], index: 4, kind: output, shape index: {2}]
  %5 = xla_tuple %s2, %s3, %s4
  %s6 = sld [smem:[#allocation0]]
  $region48: #{tpu_custom_call.1} parent=0
    _
  %s8 = ssub.s32 1, %s6
  %s9 = scalar_select 0, %s8, %s6
  $region1: #{tpu_custom_call.1} parent=0
    #allocation2 [shape = 'u8[8192]{0}', space=vmem, size = 0x2000, scoped, tag = 'output window, operand 0, single buffered']
    #allocation3 [shape = 's32[1]{0}', space=sflag, size = 0x4, scoped, tag = 'scoped memory for tpu_custom_call.1']
    #allocation4 [shape = 'u8[1024]{0}', space=vmem, size = 0x400, scoped, tag = 'output window, operand 1, single buffered']
    #allocation5 [shape = 's32[1]{0}', space=sflag, size = 0x4, scoped, tag = 'scoped memory for tpu_custom_call.1']
    %10 = vsyncpa [#allocation3], 0
    %11 = vsyncpa [#allocation5], 0
    // Predicated region
    $region2: #{tpu_custom_call.1} parent=1 // pred_check
      _
    $region3: #{tpu_custom_call.1} parent=1 // pred_check_branch
      %13 = sbr.rel (0) target = $region5
    $region4: #{tpu_custom_call.1} parent=1 // pred_region
      _
    $region5: #{tpu_custom_call.1} parent=1 // pred_fallthru
      _
    // Predicated region
    $region6: #{tpu_custom_call.1} parent=1 // pred_check
      _
    $region7: #{tpu_custom_call.1} parent=1 // pred_check_branch
      %15 = sbr.rel (0) target = $region9
    $region8: #{tpu_custom_call.1} parent=1 // pred_region
      _
    $region9: #{tpu_custom_call.1} parent=1 // pred_fallthru
      _
    %v16 = vld [vmem:[%s0] sm:$0xff]
    %v17 = vld [vmem:[%s0 + $0x8] sm:$0xff]
    %v18 = vld [vmem:[%s0 + $0x10] sm:$0xff]
    %v19 = vld [vmem:[%s0 + $0x18] sm:$0xff]
    %v20 = vld [vmem:[%s1] sm:$0x3]
    %21 = vxpose.xlu0.b32.start [1/16] %v16, 128
    %22 = vxpose.xlu0.b32.cont [2/16] %v17, 128
    %23 = vxpose.xlu0.b32.cont [3/16] 0.0, 128
    %24 = vxpose.xlu0.b32.cont [4/16] 0.0, 128
    %25 = vxpose.xlu0.b32.cont [5/16] 0.0, 128
    %26 = vxpose.xlu0.b32.cont [6/16] 0.0, 128
    %27 = vxpose.xlu0.b32.cont [7/16] 0.0, 128
    %28 = vxpose.xlu0.b32.cont [8/16] 0.0, 128
    %29 = vxpose.xlu0.b32.cont [9/16] 0.0, 128
    %30 = vxpose.xlu0.b32.cont [10/16] 0.0, 128
    %31 = vxpose.xlu0.b32.cont [11/16] 0.0, 128
    %32 = vxpose.xlu0.b32.cont [12/16] 0.0, 128
    %33 = vxpose.xlu0.b32.cont [13/16] 0.0, 128
    %34 = vxpose.xlu0.b32.cont [14/16] 0.0, 128
    %35 = vxpose.xlu0.b32.cont [15/16] 0.0, 128
    %36 = vxpose.xlu0.b32.end [16/16] 0.0, 128
    %v37 = vpop.trf.xlu0
    %v38 = vpop.trf.xlu0
    %v39 = vpop.trf.xlu0
    %v40 = vpop.trf.xlu0
    %v41 = vpop.trf.xlu0
    %v42 = vpop.trf.xlu0
    %v43 = vpop.trf.xlu0
    %v44 = vpop.trf.xlu0
    %v45 = vpop.trf.xlu0
    %v46 = vpop.trf.xlu0
    %v47 = vpop.trf.xlu0
    %v48 = vpop.trf.xlu0
    %v49 = vpop.trf.xlu0
    %v50 = vpop.trf.xlu0
    %v51 = vpop.trf.xlu0
    %v52 = vpop.trf.xlu0
    %vm53 = vcmask 130048
    %v55 = vsel %vm53, %v37, 0
    %57 = vmatprep.subr.mxu0 0.0
    %58 = vmatpush1.msra.mxu0 0.0
    %59 = vmatprep.subr.mxu0 0.0
    %60 = vmatpush1.msra.mxu0 0.0
    %61 = vmatprep.subr.mxu0 0.0
    %62 = vmatpush1.msra.mxu0 0.0
    %63 = vmatprep.subr.mxu0 0.0
    %64 = vmatpush1.msra.mxu0 0.0
    %65 = vmatprep.subr.mxu0 0.0
    %66 = vmatpush1.msra.mxu0 0.0
    %67 = vmatprep.subr.mxu0 0.0
    %68 = vmatpush1.msra.mxu0 0.0
    %69 = vmatprep.subr.mxu0 0.0
    %70 = vmatpush1.msra.mxu0 0.0
    %71 = vmatprep.subr.mxu0 0.0
    %72 = vmatpush1.msra.mxu0 0.0
    %73 = vmatprep.subr.mxu0 0.0
    %74 = vmatpush1.msra.mxu0 0.0
    %75 = vmatprep.subr.mxu0 0.0
    %76 = vmatpush1.msra.mxu0 0.0
    %77 = vmatprep.subr.mxu0 0.0
    %78 = vmatpush1.msra.mxu0 0.0
    %79 = vmatprep.subr.mxu0 0.0
    %80 = vmatpush1.msra.mxu0 0.0
    %81 = vmatprep.subr.mxu0 0.0
    %82 = vmatpush1.msra.mxu0 0.0
    %83 = vmatprep.subr.mxu0 0.0
    %84 = vmatpush1.msra.mxu0 0.0
    %85 = vmatprep.subr.mxu0 0.0
    %86 = vmatpush1.msra.mxu0 %v17
    %87 = vmatprep.subr.mxu0 0.0
    %88 = vmatpush1.msra.mxu0 %v16
    %89 = vmatprep.subr.mxu0 0.0
    %90 = vmatpush2.msra.mxu0 0.0
    %91 = vmatprep.subr.mxu0 0.0
    %92 = vmatpush2.msra.mxu0 0.0
    %93 = vmatprep.subr.mxu0 0.0
    %94 = vmatpush2.msra.mxu0 0.0
    %95 = vmatprep.subr.mxu0 0.0
    %96 = vmatpush2.msra.mxu0 0.0
    %97 = vmatprep.subr.mxu0 0.0
    %98 = vmatpush2.msra.mxu0 0.0
    %99 = vmatprep.subr.mxu0 0.0
    %100 = vmatpush2.msra.mxu0 0.0
    %101 = vmatprep.subr.mxu0 0.0
    %102 = vmatpush2.msra.mxu0 0.0
    %103 = vmatprep.subr.mxu0 0.0
    %104 = vmatpush2.msra.mxu0 0.0
    %105 = vmatprep.subr.mxu0 0.0
    %106 = vmatpush2.msra.mxu0 0.0
    %107 = vmatprep.subr.mxu0 0.0
    %108 = vmatpush2.msra.mxu0 0.0
    %109 = vmatprep.subr.mxu0 0.0
    %110 = vmatpush2.msra.mxu0 0.0
    %111 = vmatprep.subr.mxu0 0.0
    %112 = vmatpush2.msra.mxu0 0.0
    %113 = vmatprep.subr.mxu0 0.0
    %114 = vmatpush2.msra.mxu0 0.0
    %115 = vmatprep.subr.mxu0 0.0
    %116 = vmatpush2.msra.mxu0 0.0
    %117 = vmatprep.subr.mxu0 0.0
    %118 = vmatpush2.msra.mxu0 0.0
    %119 = vmatprep.subr.mxu0 0.0
    %120 = vmatpush2.msra.mxu0 0.0
    %121 = vmatprep.mubr.f32.mxu0 0.0
    %122 = vmatmul.mubr.f32.gmra.mxu0 %v55
    %v123 = vpop.f32.mrf.mxu0
    %v124 = vadd.f32 0.0, %v123
    %v125 = vpop.f32.mrf.mxu0
    %126 = vdwg.mxu0
    %127 = vxpose.xlu0.b32.start [1/16] %v18, 128
    %128 = vxpose.xlu0.b32.cont [2/16] %v19, 128
    %129 = vxpose.xlu0.b32.cont [3/16] 0.0, 128
    %130 = vxpose.xlu0.b32.cont [4/16] 0.0, 128
    %131 = vxpose.xlu0.b32.cont [5/16] 0.0, 128
    %132 = vxpose.xlu0.b32.cont [6/16] 0.0, 128
    %133 = vxpose.xlu0.b32.cont [7/16] 0.0, 128
    %134 = vxpose.xlu0.b32.cont [8/16] 0.0, 128
    %135 = vxpose.xlu0.b32.cont [9/16] 0.0, 128
    %136 = vxpose.xlu0.b32.cont [10/16] 0.0, 128
    %137 = vxpose.xlu0.b32.cont [11/16] 0.0, 128
    %138 = vxpose.xlu0.b32.cont [12/16] 0.0, 128
    %139 = vxpose.xlu0.b32.cont [13/16] 0.0, 128
    %140 = vxpose.xlu0.b32.cont [14/16] 0.0, 128
    %141 = vxpose.xlu0.b32.cont [15/16] 0.0, 128
    %142 = vxpose.xlu0.b32.end [16/16] 0.0, 128
    %v143 = vpop.trf.xlu0
    %v144 = vpop.trf.xlu0
    %v145 = vpop.trf.xlu0
    %v146 = vpop.trf.xlu0
    %v147 = vpop.trf.xlu0
    %v148 = vpop.trf.xlu0
    %v149 = vpop.trf.xlu0
    %v150 = vpop.trf.xlu0
    %v151 = vpop.trf.xlu0
    %v152 = vpop.trf.xlu0
    %v153 = vpop.trf.xlu0
    %v154 = vpop.trf.xlu0
    %v155 = vpop.trf.xlu0
    %v156 = vpop.trf.xlu0
    %v157 = vpop.trf.xlu0
    %v158 = vpop.trf.xlu0
    %v160 = vsel %vm53, %v143, 0
    %162 = vmatprep.subr.mxu0 0.0
    %163 = vmatpush1.msra.mxu0 0.0
    %164 = vmatprep.subr.mxu0 0.0
    %165 = vmatpush1.msra.mxu0 0.0
    %166 = vmatprep.subr.mxu0 0.0
    %167 = vmatpush1.msra.mxu0 0.0
    %168 = vmatprep.subr.mxu0 0.0
    %169 = vmatpush1.msra.mxu0 0.0
    %170 = vmatprep.subr.mxu0 0.0
    %171 = vmatpush1.msra.mxu0 0.0
    %172 = vmatprep.subr.mxu0 0.0
    %173 = vmatpush1.msra.mxu0 0.0
    %174 = vmatprep.subr.mxu0 0.0
    %175 = vmatpush1.msra.mxu0 0.0
    %176 = vmatprep.subr.mxu0 0.0
    %177 = vmatpush1.msra.mxu0 0.0
    %178 = vmatprep.subr.mxu0 0.0
    %179 = vmatpush1.msra.mxu0 0.0
    %180 = vmatprep.subr.mxu0 0.0
    %181 = vmatpush1.msra.mxu0 0.0
    %182 = vmatprep.subr.mxu0 0.0
    %183 = vmatpush1.msra.mxu0 0.0
    %184 = vmatprep.subr.mxu0 0.0
    %185 = vmatpush1.msra.mxu0 0.0
    %186 = vmatprep.subr.mxu0 0.0
    %187 = vmatpush1.msra.mxu0 0.0
    %188 = vmatprep.subr.mxu0 0.0
    %189 = vmatpush1.msra.mxu0 0.0
    %190 = vmatprep.subr.mxu0 0.0
    %191 = vmatpush1.msra.mxu0 %v19
    %192 = vmatprep.subr.mxu0 0.0
    %193 = vmatpush1.msra.mxu0 %v18
    %194 = vmatprep.subr.mxu0 0.0
    %195 = vmatpush2.msra.mxu0 0.0
    %196 = vmatprep.subr.mxu0 0.0
    %197 = vmatpush2.msra.mxu0 0.0
    %198 = vmatprep.subr.mxu0 0.0
    %199 = vmatpush2.msra.mxu0 0.0
    %200 = vmatprep.subr.mxu0 0.0
    %201 = vmatpush2.msra.mxu0 0.0
    %202 = vmatprep.subr.mxu0 0.0
    %203 = vmatpush2.msra.mxu0 0.0
    %204 = vmatprep.subr.mxu0 0.0
    %205 = vmatpush2.msra.mxu0 0.0
    %206 = vmatprep.subr.mxu0 0.0
    %207 = vmatpush2.msra.mxu0 0.0
    %208 = vmatprep.subr.mxu0 0.0
    %209 = vmatpush2.msra.mxu0 0.0
    %210 = vmatprep.subr.mxu0 0.0
    %211 = vmatpush2.msra.mxu0 0.0
    %212 = vmatprep.subr.mxu0 0.0
    %213 = vmatpush2.msra.mxu0 0.0
    %214 = vmatprep.subr.mxu0 0.0
    %215 = vmatpush2.msra.mxu0 0.0
    %216 = vmatprep.subr.mxu0 0.0
    %217 = vmatpush2.msra.mxu0 0.0
    %218 = vmatprep.subr.mxu0 0.0
    %219 = vmatpush2.msra.mxu0 0.0
    %220 = vmatprep.subr.mxu0 0.0
    %221 = vmatpush2.msra.mxu0 0.0
    %222 = vmatprep.subr.mxu0 0.0
    %223 = vmatpush2.msra.mxu0 0.0
    %224 = vmatprep.subr.mxu0 0.0
    %225 = vmatpush2.msra.mxu0 0.0
    %226 = vmatprep.mubr.f32.mxu0 0.0
    %227 = vmatmul.mubr.f32.gmra.mxu0 %v160
    %v228 = vpop.f32.mrf.mxu0
    %v229 = vadd.f32 0.0, %v228
    %v230 = vpop.f32.mrf.mxu0
    %231 = vdwg.mxu0
    %vm232 = vcmask 64512
    %233 = vst.msk [vmem:[#allocation2] sm:$0xff] %vm232, %v124
    %234 = vst.msk [vmem:[#allocation2 + $0x8] sm:$0xff] %vm232, %v229
    %v235 = vlaneseq
    %v236 = vshrl.u32 %v235, 7
    %v237 = vsub.s32 0, %v236
    %v238 = vrot.slane %v20, %v237
    %240 = vbcast.lane.b32.xlu0 %v238, 256
    %v241 = vpop.permute.xlu0 %240
    %s243 = sor.u32 256, 8
    %244 = vbcast.lane.b32.xlu0 %v238, %s243
    %v245 = vpop.permute.xlu0 %244
    %v246 = vlaneseq
    %v247 = vshrl.u32 %v246, 7
    %v248 = vsub.s32 1, %v247
    %v249 = vrot.slane %v20, %v248
    %251 = vbcast.lane.b32.xlu0 %v249, 256
    %v252 = vpop.permute.xlu0 %251
    %s254 = sor.u32 256, 8
    %255 = vbcast.lane.b32.xlu0 %v249, %s254
    %v256 = vpop.permute.xlu0 %255
    %v257 = vmul.f32 %v16, %v241
    %v258 = vmul.f32 %v17, %v245
    %v259 = vmul.f32 %v18, %v252
    %v260 = vmul.f32 %v19, %v256
    %v261 = vsel %vm232, %v257, 0.0
    %v262 = vsel %vm232, %v258, 0.0
    %v263 = vadd.f32 %v261, %v262
    %v264 = vrot.slane %v263, 4
    %v265 = vadd.f32 %v263, %v264
    %v266 = vrot.slane %v265, 2
    %v267 = vadd.f32 %v265, %v266
    %v268 = vrot.slane %v267, 1
    %v269 = vadd.f32 %v267, %v268
    %v270 = vsel %vm232, %v259, 0.0
    %v271 = vsel %vm232, %v260, 0.0
    %v272 = vadd.f32 %v270, %v271
    %v273 = vrot.slane %v272, 4
    %v274 = vadd.f32 %v272, %v273
    %v275 = vrot.slane %v274, 2
    %v276 = vadd.f32 %v274, %v275
    %v277 = vrot.slane %v276, 1
    %v278 = vadd.f32 %v276, %v277
    %vm281 = vcmask 1041409
    %v282 = vsel %vm281, %v278, %v269
    %vm284 = vcmask 58368
    %285 = vst.msk [vmem:[#allocation4] sm:$0x3] %vm284, %v282
    %v286 = vand.u32 2147483647, %v124
    %v287 = vand.u32 2147483647, %v229
    %v288 = vsel %vm232, %v286, 0.0
    %289 = vadd.xlane.f32.xlu0 %v288
    %v290 = vpop.xlane.xlu0 %289
    %v291 = vsel %vm232, %v287, 0.0
    %292 = vadd.xlane.f32.xlu0 %v291
    %v293 = vpop.xlane.xlu0 %292
    %v296 = vlaneseq
    %v297 = vand.u32 %v296, 127
    %v298 = vlaneseq
    %v299 = vshrl.u32 %v298, 7
    %v300 = vsub.s32 %v297, %v299
    %v301 = vrot.slane %v290, %v300
    %v302 = vlaneseq
    %v303 = vshrl.u32 %v302, 7
    %v304 = vsub.s32 %v297, %v303
    %v305 = vrot.slane %v293, %v304
    %v306 = vsel %vm281, %v305, %v301
    %v308 = vsel %vm284, %v306, -inf
    %309 = vmax.xlane.f32.xlu0 %v308
    %v310 = vpop.xlane.xlu0 %309
    %v311 = vmax.f32 %v310, 1e-30
    %v313 = vlaneseq
    %v314 = vshrl.u32 %v313, 7
    %v315 = vsub.s32 0, %v314
    %v316 = vrot.slane %v311, %v315
    %v317 = vlaneseq
    %v318 = vshrl.u32 %v317, 7
    %v319 = vsub.s32 1, %v318
    %v320 = vrot.slane %v311, %v319
    %v323 = vrcp.pop %v316
    %v324 = vmul.f32 %v124, %v323
    %v325 = vrcp.pop %v320
    %v326 = vmul.f32 %v229, %v325
    %v328 = vsel %vm232, %v324, 0
    %330 = vmatprep.subr.mxu0 0.0
    %331 = vmatpush1.msra.mxu0 0.0
    %332 = vmatprep.subr.mxu0 0.0
    %333 = vmatpush1.msra.mxu0 0.0
    %334 = vmatprep.subr.mxu0 0.0
    %335 = vmatpush1.msra.mxu0 0.0
    %336 = vmatprep.subr.mxu0 0.0
    %337 = vmatpush1.msra.mxu0 0.0
    %338 = vmatprep.subr.mxu0 0.0
    %339 = vmatpush1.msra.mxu0 0.0
    %340 = vmatprep.subr.mxu0 0.0
    %341 = vmatpush1.msra.mxu0 0.0
    %342 = vmatprep.subr.mxu0 0.0
    %343 = vmatpush1.msra.mxu0 0.0
    %344 = vmatprep.subr.mxu0 0.0
    %345 = vmatpush1.msra.mxu0 0.0
    %346 = vmatprep.subr.mxu0 0.0
    %347 = vmatpush1.msra.mxu0 0.0
    %348 = vmatprep.subr.mxu0 0.0
    %349 = vmatpush1.msra.mxu0 0.0
    %350 = vmatprep.subr.mxu0 0.0
    %351 = vmatpush1.msra.mxu0 0.0
    %352 = vmatprep.subr.mxu0 0.0
    %353 = vmatpush1.msra.mxu0 0.0
    %354 = vmatprep.subr.mxu0 0.0
    %355 = vmatpush1.msra.mxu0 0.0
    %356 = vmatprep.subr.mxu0 0.0
    %357 = vmatpush1.msra.mxu0 0.0
    %358 = vmatprep.subr.mxu0 0.0
    %359 = vmatpush1.msra.mxu0 0.0
    %360 = vmatprep.subr.mxu0 0.0
    %361 = vmatpush1.msra.mxu0 %v324
    %362 = vmatprep.subr.mxu0 0.0
    %363 = vmatpush2.msra.mxu0 0.0
    %364 = vmatprep.subr.mxu0 0.0
    %365 = vmatpush2.msra.mxu0 0.0
    %366 = vmatprep.subr.mxu0 0.0
    %367 = vmatpush2.msra.mxu0 0.0
    %368 = vmatprep.subr.mxu0 0.0
    %369 = vmatpush2.msra.mxu0 0.0
    %370 = vmatprep.subr.mxu0 0.0
    %371 = vmatpush2.msra.mxu0 0.0
    %372 = vmatprep.subr.mxu0 0.0
    %373 = vmatpush2.msra.mxu0 0.0
    %374 = vmatprep.subr.mxu0 0.0
    %375 = vmatpush2.msra.mxu0 0.0
    %376 = vmatprep.subr.mxu0 0.0
    %377 = vmatpush2.msra.mxu0 0.0
    %378 = vmatprep.subr.mxu0 0.0
    %379 = vmatpush2.msra.mxu0 0.0
    %380 = vmatprep.subr.mxu0 0.0
    %381 = vmatpush2.msra.mxu0 0.0
    %382 = vmatprep.subr.mxu0 0.0
    %383 = vmatpush2.msra.mxu0 0.0
    %384 = vmatprep.subr.mxu0 0.0
    %385 = vmatpush2.msra.mxu0 0.0
    %386 = vmatprep.subr.mxu0 0.0
    %387 = vmatpush2.msra.mxu0 0.0
    %388 = vmatprep.subr.mxu0 0.0
    %389 = vmatpush2.msra.mxu0 0.0
    %390 = vmatprep.subr.mxu0 0.0
    %391 = vmatpush2.msra.mxu0 0.0
    %392 = vmatprep.subr.mxu0 0.0
    %393 = vmatpush2.msra.mxu0 0.0
    %394 = vmatprep.mubr.f32.mxu0 0.0
    %395 = vmatmul.mubr.f32.gmra.mxu0 %v328
    %v396 = vpop.f32.mrf.mxu0
    %v397 = vadd.f32 0.0, %v396
    %v398 = vpop.f32.mrf.mxu0
    %399 = vdwg.mxu0
    %v401 = vsel %vm232, %v326, 0
    %403 = vmatprep.subr.mxu0 0.0
    %404 = vmatpush1.msra.mxu0 0.0
    %405 = vmatprep.subr.mxu0 0.0
    %406 = vmatpush1.msra.mxu0 0.0
    %407 = vmatprep.subr.mxu0 0.0
    %408 = vmatpush1.msra.mxu0 0.0
    %409 = vmatprep.subr.mxu0 0.0
    %410 = vmatpush1.msra.mxu0 0.0
    %411 = vmatprep.subr.mxu0 0.0
    %412 = vmatpush1.msra.mxu0 0.0
    %413 = vmatprep.subr.mxu0 0.0
    %414 = vmatpush1.msra.mxu0 0.0
    %415 = vmatprep.subr.mxu0 0.0
    %416 = vmatpush1.msra.mxu0 0.0
    %417 = vmatprep.subr.mxu0 0.0
    %418 = vmatpush1.msra.mxu0 0.0
    %419 = vmatprep.subr.mxu0 0.0
    %420 = vmatpush1.msra.mxu0 0.0
    %421 = vmatprep.subr.mxu0 0.0
    %422 = vmatpush1.msra.mxu0 0.0
    %423 = vmatprep.subr.mxu0 0.0
    %424 = vmatpush1.msra.mxu0 0.0
    %425 = vmatprep.subr.mxu0 0.0
    %426 = vmatpush1.msra.mxu0 0.0
    %427 = vmatprep.subr.mxu0 0.0
    %428 = vmatpush1.msra.mxu0 0.0
    %429 = vmatprep.subr.mxu0 0.0
    %430 = vmatpush1.msra.mxu0 0.0
    %431 = vmatprep.subr.mxu0 0.0
    %432 = vmatpush1.msra.mxu0 0.0
    %433 = vmatprep.subr.mxu0 0.0
    %434 = vmatpush1.msra.mxu0 %v326
    %435 = vmatprep.subr.mxu0 0.0
    %436 = vmatpush2.msra.mxu0 0.0
    %437 = vmatprep.subr.mxu0 0.0
    %438 = vmatpush2.msra.mxu0 0.0
    %439 = vmatprep.subr.mxu0 0.0
    %440 = vmatpush2.msra.mxu0 0.0
    %441 = vmatprep.subr.mxu0 0.0
    %442 = vmatpush2.msra.mxu0 0.0
    %443 = vmatprep.subr.mxu0 0.0
    %444 = vmatpush2.msra.mxu0 0.0
    %445 = vmatprep.subr.mxu0 0.0
    %446 = vmatpush2.msra.mxu0 0.0
    %447 = vmatprep.subr.mxu0 0.0
    %448 = vmatpush2.msra.mxu0 0.0
    %449 = vmatprep.subr.mxu0 0.0
    %450 = vmatpush2.msra.mxu0 0.0
    %451 = vmatprep.subr.mxu0 0.0
    %452 = vmatpush2.msra.mxu0 0.0
    %453 = vmatprep.subr.mxu0 0.0
    %454 = vmatpush2.msra.mxu0 0.0
    %455 = vmatprep.subr.mxu0 0.0
    %456 = vmatpush2.msra.mxu0 0.0
    %457 = vmatprep.subr.mxu0 0.0
    %458 = vmatpush2.msra.mxu0 0.0
    %459 = vmatprep.subr.mxu0 0.0
    %460 = vmatpush2.msra.mxu0 0.0
    %461 = vmatprep.subr.mxu0 0.0
    %462 = vmatpush2.msra.mxu0 0.0
    %463 = vmatprep.subr.mxu0 0.0
    %464 = vmatpush2.msra.mxu0 0.0
    %465 = vmatprep.subr.mxu0 0.0
    %466 = vmatpush2.msra.mxu0 0.0
    %467 = vmatprep.mubr.f32.mxu0 0.0
    %468 = vmatmul.mubr.f32.gmra.mxu0 %v401
    %v469 = vpop.f32.mrf.mxu0
    %v470 = vadd.f32 0.0, %v469
    %v471 = vpop.f32.mrf.mxu0
    %472 = vdwg.mxu0
    %v474 = vsel %vm232, %v397, 0
    %476 = vmatprep.subr.mxu0 0.0
    %477 = vmatpush1.msra.mxu0 0.0
    %478 = vmatprep.subr.mxu0 0.0
    %479 = vmatpush1.msra.mxu0 0.0
    %480 = vmatprep.subr.mxu0 0.0
    %481 = vmatpush1.msra.mxu0 0.0
    %482 = vmatprep.subr.mxu0 0.0
    %483 = vmatpush1.msra.mxu0 0.0
    %484 = vmatprep.subr.mxu0 0.0
    %485 = vmatpush1.msra.mxu0 0.0
    %486 = vmatprep.subr.mxu0 0.0
    %487 = vmatpush1.msra.mxu0 0.0
    %488 = vmatprep.subr.mxu0 0.0
    %489 = vmatpush1.msra.mxu0 0.0
    %490 = vmatprep.subr.mxu0 0.0
    %491 = vmatpush1.msra.mxu0 0.0
    %492 = vmatprep.subr.mxu0 0.0
    %493 = vmatpush1.msra.mxu0 0.0
    %494 = vmatprep.subr.mxu0 0.0
    %495 = vmatpush1.msra.mxu0 0.0
    %496 = vmatprep.subr.mxu0 0.0
    %497 = vmatpush1.msra.mxu0 0.0
    %498 = vmatprep.subr.mxu0 0.0
    %499 = vmatpush1.msra.mxu0 0.0
    %500 = vmatprep.subr.mxu0 0.0
    %501 = vmatpush1.msra.mxu0 0.0
    %502 = vmatprep.subr.mxu0 0.0
    %503 = vmatpush1.msra.mxu0 0.0
    %504 = vmatprep.subr.mxu0 0.0
    %505 = vmatpush1.msra.mxu0 0.0
    %506 = vmatprep.subr.mxu0 0.0
    %507 = vmatpush1.msra.mxu0 %v397
    %508 = vmatprep.subr.mxu0 0.0
    %509 = vmatpush2.msra.mxu0 0.0
    %510 = vmatprep.subr.mxu0 0.0
    %511 = vmatpush2.msra.mxu0 0.0
    %512 = vmatprep.subr.mxu0 0.0
    %513 = vmatpush2.msra.mxu0 0.0
    %514 = vmatprep.subr.mxu0 0.0
    %515 = vmatpush2.msra.mxu0 0.0
    %516 = vmatprep.subr.mxu0 0.0
    %517 = vmatpush2.msra.mxu0 0.0
    %518 = vmatprep.subr.mxu0 0.0
    %519 = vmatpush2.msra.mxu0 0.0
    %520 = vmatprep.subr.mxu0 0.0
    %521 = vmatpush2.msra.mxu0 0.0
    %522 = vmatprep.subr.mxu0 0.0
    %523 = vmatpush2.msra.mxu0 0.0
    %524 = vmatprep.subr.mxu0 0.0
    %525 = vmatpush2.msra.mxu0 0.0
    %526 = vmatprep.subr.mxu0 0.0
    %527 = vmatpush2.msra.mxu0 0.0
    %528 = vmatprep.subr.mxu0 0.0
    %529 = vmatpush2.msra.mxu0 0.0
    %530 = vmatprep.subr.mxu0 0.0
    %531 = vmatpush2.msra.mxu0 0.0
    %532 = vmatprep.subr.mxu0 0.0
    %533 = vmatpush2.msra.mxu0 0.0
    %534 = vmatprep.subr.mxu0 0.0
    %535 = vmatpush2.msra.mxu0 0.0
    %536 = vmatprep.subr.mxu0 0.0
    %537 = vmatpush2.msra.mxu0 0.0
    %538 = vmatprep.subr.mxu0 0.0
    %539 = vmatpush2.msra.mxu0 0.0
    %540 = vmatprep.mubr.f32.mxu0 0.0
    %541 = vmatmul.mubr.f32.gmra.mxu0 %v474
    %v542 = vpop.f32.mrf.mxu0
    %v543 = vadd.f32 0.0, %v542
    %v544 = vpop.f32.mrf.mxu0
    %545 = vdwg.mxu0
    %v547 = vsel %vm232, %v470, 0
    %549 = vmatprep.subr.mxu0 0.0
    %550 = vmatpush1.msra.mxu0 0.0
    %551 = vmatprep.subr.mxu0 0.0
    %552 = vmatpush1.msra.mxu0 0.0
    %553 = vmatprep.subr.mxu0 0.0
    %554 = vmatpush1.msra.mxu0 0.0
    %555 = vmatprep.subr.mxu0 0.0
    %556 = vmatpush1.msra.mxu0 0.0
    %557 = vmatprep.subr.mxu0 0.0
    %558 = vmatpush1.msra.mxu0 0.0
    %559 = vmatprep.subr.mxu0 0.0
    %560 = vmatpush1.msra.mxu0 0.0
    %561 = vmatprep.subr.mxu0 0.0
    %562 = vmatpush1.msra.mxu0 0.0
    %563 = vmatprep.subr.mxu0 0.0
    %564 = vmatpush1.msra.mxu0 0.0
    %565 = vmatprep.subr.mxu0 0.0
    %566 = vmatpush1.msra.mxu0 0.0
    %567 = vmatprep.subr.mxu0 0.0
    %568 = vmatpush1.msra.mxu0 0.0
    %569 = vmatprep.subr.mxu0 0.0
    %570 = vmatpush1.msra.mxu0 0.0
    %571 = vmatprep.subr.mxu0 0.0
    %572 = vmatpush1.msra.mxu0 0.0
    %573 = vmatprep.subr.mxu0 0.0
    %574 = vmatpush1.msra.mxu0 0.0
    %575 = vmatprep.subr.mxu0 0.0
    %576 = vmatpush1.msra.mxu0 0.0
    %577 = vmatprep.subr.mxu0 0.0
    %578 = vmatpush1.msra.mxu0 0.0
    %579 = vmatprep.subr.mxu0 0.0
    %580 = vmatpush1.msra.mxu0 %v470
    %581 = vmatprep.subr.mxu0 0.0
    %582 = vmatpush2.msra.mxu0 0.0
    %583 = vmatprep.subr.mxu0 0.0
    %584 = vmatpush2.msra.mxu0 0.0
    %585 = vmatprep.subr.mxu0 0.0
    %586 = vmatpush2.msra.mxu0 0.0
    %587 = vmatprep.subr.mxu0 0.0
    %588 = vmatpush2.msra.mxu0 0.0
    %589 = vmatprep.subr.mxu0 0.0
    %590 = vmatpush2.msra.mxu0 0.0
    %591 = vmatprep.subr.mxu0 0.0
    %592 = vmatpush2.msra.mxu0 0.0
    %593 = vmatprep.subr.mxu0 0.0
    %594 = vmatpush2.msra.mxu0 0.0
    %595 = vmatprep.subr.mxu0 0.0
    %596 = vmatpush2.msra.mxu0 0.0
    %597 = vmatprep.subr.mxu0 0.0
    %598 = vmatpush2.msra.mxu0 0.0
    %599 = vmatprep.subr.mxu0 0.0
    %600 = vmatpush2.msra.mxu0 0.0
    %601 = vmatprep.subr.mxu0 0.0
    %602 = vmatpush2.msra.mxu0 0.0
    %603 = vmatprep.subr.mxu0 0.0
    %604 = vmatpush2.msra.mxu0 0.0
    %605 = vmatprep.subr.mxu0 0.0
    %606 = vmatpush2.msra.mxu0 0.0
    %607 = vmatprep.subr.mxu0 0.0
    %608 = vmatpush2.msra.mxu0 0.0
    %609 = vmatprep.subr.mxu0 0.0
    %610 = vmatpush2.msra.mxu0 0.0
    %611 = vmatprep.subr.mxu0 0.0
    %612 = vmatpush2.msra.mxu0 0.0
    %613 = vmatprep.mubr.f32.mxu0 0.0
    %614 = vmatmul.mubr.f32.gmra.mxu0 %v547
    %v615 = vpop.f32.mrf.mxu0
    %v616 = vadd.f32 0.0, %v615
    %v617 = vpop.f32.mrf.mxu0
    %618 = vdwg.mxu0
    %v620 = vsel %vm232, %v543, 0
    %622 = vmatprep.subr.mxu0 0.0
    %623 = vmatpush1.msra.mxu0 0.0
    %624 = vmatprep.subr.mxu0 0.0
    %625 = vmatpush1.msra.mxu0 0.0
    %626 = vmatprep.subr.mxu0 0.0
    %627 = vmatpush1.msra.mxu0 0.0
    %628 = vmatprep.subr.mxu0 0.0
    %629 = vmatpush1.msra.mxu0 0.0
    %630 = vmatprep.subr.mxu0 0.0
    %631 = vmatpush1.msra.mxu0 0.0
    %632 = vmatprep.subr.mxu0 0.0
    %633 = vmatpush1.msra.mxu0 0.0
    %634 = vmatprep.subr.mxu0 0.0
    %635 = vmatpush1.msra.mxu0 0.0
    %636 = vmatprep.subr.mxu0 0.0
    %637 = vmatpush1.msra.mxu0 0.0
    %638 = vmatprep.subr.mxu0 0.0
    %639 = vmatpush1.msra.mxu0 0.0
    %640 = vmatprep.subr.mxu0 0.0
    %641 = vmatpush1.msra.mxu0 0.0
    %642 = vmatprep.subr.mxu0 0.0
    %643 = vmatpush1.msra.mxu0 0.0
    %644 = vmatprep.subr.mxu0 0.0
    %645 = vmatpush1.msra.mxu0 0.0
    %646 = vmatprep.subr.mxu0 0.0
    %647 = vmatpush1.msra.mxu0 0.0
    %648 = vmatprep.subr.mxu0 0.0
    %649 = vmatpush1.msra.mxu0 0.0
    %650 = vmatprep.subr.mxu0 0.0
    %651 = vmatpush1.msra.mxu0 0.0
    %652 = vmatprep.subr.mxu0 0.0
    %653 = vmatpush1.msra.mxu0 %v543
    %654 = vmatprep.subr.mxu0 0.0
    %655 = vmatpush2.msra.mxu0 0.0
    %656 = vmatprep.subr.mxu0 0.0
    %657 = vmatpush2.msra.mxu0 0.0
    %658 = vmatprep.subr.mxu0 0.0
    %659 = vmatpush2.msra.mxu0 0.0
    %660 = vmatprep.subr.mxu0 0.0
    %661 = vmatpush2.msra.mxu0 0.0
    %662 = vmatprep.subr.mxu0 0.0
    %663 = vmatpush2.msra.mxu0 0.0
    %664 = vmatprep.subr.mxu0 0.0
    %665 = vmatpush2.msra.mxu0 0.0
    %666 = vmatprep.subr.mxu0 0.0
    %667 = vmatpush2.msra.mxu0 0.0
    %668 = vmatprep.subr.mxu0 0.0
    %669 = vmatpush2.msra.mxu0 0.0
    %670 = vmatprep.subr.mxu0 0.0
    %671 = vmatpush2.msra.mxu0 0.0
    %672 = vmatprep.subr.mxu0 0.0
    %673 = vmatpush2.msra.mxu0 0.0
    %674 = vmatprep.subr.mxu0 0.0
    %675 = vmatpush2.msra.mxu0 0.0
    %676 = vmatprep.subr.mxu0 0.0
    %677 = vmatpush2.msra.mxu0 0.0
    %678 = vmatprep.subr.mxu0 0.0
    %679 = vmatpush2.msra.mxu0 0.0
    %680 = vmatprep.subr.mxu0 0.0
    %681 = vmatpush2.msra.mxu0 0.0
    %682 = vmatprep.subr.mxu0 0.0
    %683 = vmatpush2.msra.mxu0 0.0
    %684 = vmatprep.subr.mxu0 0.0
    %685 = vmatpush2.msra.mxu0 0.0
    %686 = vmatprep.mubr.f32.mxu0 0.0
    %687 = vmatmul.mubr.f32.gmra.mxu0 %v620
    %v688 = vpop.f32.mrf.mxu0
    %v689 = vadd.f32 0.0, %v688
    %v690 = vpop.f32.mrf.mxu0
    %691 = vdwg.mxu0
    %v693 = vsel %vm232, %v616, 0
    %695 = vmatprep.subr.mxu0 0.0
    %696 = vmatpush1.msra.mxu0 0.0
    %697 = vmatprep.subr.mxu0 0.0
    %698 = vmatpush1.msra.mxu0 0.0
    %699 = vmatprep.subr.mxu0 0.0
    %700 = vmatpush1.msra.mxu0 0.0
    %701 = vmatprep.subr.mxu0 0.0
    %702 = vmatpush1.msra.mxu0 0.0
    %703 = vmatprep.subr.mxu0 0.0
    %704 = vmatpush1.msra.mxu0 0.0
    %705 = vmatprep.subr.mxu0 0.0
    %706 = vmatpush1.msra.mxu0 0.0
    %707 = vmatprep.subr.mxu0 0.0
    %708 = vmatpush1.msra.mxu0 0.0
    %709 = vmatprep.subr.mxu0 0.0
    %710 = vmatpush1.msra.mxu0 0.0
    %711 = vmatprep.subr.mxu0 0.0
    %712 = vmatpush1.msra.mxu0 0.0
    %713 = vmatprep.subr.mxu0 0.0
    %714 = vmatpush1.msra.mxu0 0.0
    %715 = vmatprep.subr.mxu0 0.0
    %716 = vmatpush1.msra.mxu0 0.0
    %717 = vmatprep.subr.mxu0 0.0
    %718 = vmatpush1.msra.mxu0 0.0
    %719 = vmatprep.subr.mxu0 0.0
    %720 = vmatpush1.msra.mxu0 0.0
    %721 = vmatprep.subr.mxu0 0.0
    %722 = vmatpush1.msra.mxu0 0.0
    %723 = vmatprep.subr.mxu0 0.0
    %724 = vmatpush1.msra.mxu0 0.0
    %725 = vmatprep.subr.mxu0 0.0
    %726 = vmatpush1.msra.mxu0 %v616
    %727 = vmatprep.subr.mxu0 0.0
    %728 = vmatpush2.msra.mxu0 0.0
    %729 = vmatprep.subr.mxu0 0.0
    %730 = vmatpush2.msra.mxu0 0.0
    %731 = vmatprep.subr.mxu0 0.0
    %732 = vmatpush2.msra.mxu0 0.0
    %733 = vmatprep.subr.mxu0 0.0
    %734 = vmatpush2.msra.mxu0 0.0
    %735 = vmatprep.subr.mxu0 0.0
    %736 = vmatpush2.msra.mxu0 0.0
    %737 = vmatprep.subr.mxu0 0.0
    %738 = vmatpush2.msra.mxu0 0.0
    %739 = vmatprep.subr.mxu0 0.0
    %740 = vmatpush2.msra.mxu0 0.0
    %741 = vmatprep.subr.mxu0 0.0
    %742 = vmatpush2.msra.mxu0 0.0
    %743 = vmatprep.subr.mxu0 0.0
    %744 = vmatpush2.msra.mxu0 0.0
    %745 = vmatprep.subr.mxu0 0.0
    %746 = vmatpush2.msra.mxu0 0.0
    %747 = vmatprep.subr.mxu0 0.0
    %748 = vmatpush2.msra.mxu0 0.0
    %749 = vmatprep.subr.mxu0 0.0
    %750 = vmatpush2.msra.mxu0 0.0
    %751 = vmatprep.subr.mxu0 0.0
    %752 = vmatpush2.msra.mxu0 0.0
    %753 = vmatprep.subr.mxu0 0.0
    %754 = vmatpush2.msra.mxu0 0.0
    %755 = vmatprep.subr.mxu0 0.0
    %756 = vmatpush2.msra.mxu0 0.0
    %757 = vmatprep.subr.mxu0 0.0
    %758 = vmatpush2.msra.mxu0 0.0
    %759 = vmatprep.mubr.f32.mxu0 0.0
    %760 = vmatmul.mubr.f32.gmra.mxu0 %v693
    %v761 = vpop.f32.mrf.mxu0
    %v762 = vadd.f32 0.0, %v761
    %v763 = vpop.f32.mrf.mxu0
    %764 = vdwg.mxu0
    loop: start=0, step=1, limit=32
    $region10: #{tpu_custom_call.1} parent=1 // loop_pre_header
      _
    $region11: #{tpu_custom_call.1} parent=1 // loop_header
      %s766 = sphi 0, %s770
      %p767 = scmp.ge.s32.totalorder %s766, 32
      %v771 = vphi 1.0, %v854
      %v772 = vphi 1.0, %v856
    $region12: #{tpu_custom_call.1} parent=1 // loop_header_branch
      %769 = sbr.rel (%p767) target = $region16
    $region13: #{tpu_custom_call.1} parent=1 // loop_body
      %775 = vset.pattern.permute.xlu0 0
      %776 = vperm.xlu0 %775, %v771
      %v777 = vpop.permute.xlu0 %776
      %778 = vset.pattern.permute.xlu0 0
      %779 = vperm.xlu0 %778, %v772
      %v780 = vpop.permute.xlu0 %779
      %v781 = vlaneseq
      %v782 = vshrl.u32 %v781, 7
      %v783 = vsub.s32 %v297, %v782
      %v784 = vrot.slane %v777, %v783
      %v785 = vlaneseq
      %v786 = vshrl.u32 %v785, 7
      %v787 = vsub.s32 %v297, %v786
      %v788 = vrot.slane %v780, %v787
      %vm789 = vcmask 1042434
      %v790 = vsel %vm789, %v784, %v784
      %vm791 = vcmask 1043459
      %v792 = vsel %vm791, %v784, %v790
      %vm793 = vcmask 1044484
      %v794 = vsel %vm793, %v784, %v792
      %vm795 = vcmask 1045509
      %v796 = vsel %vm795, %v784, %v794
      %vm797 = vcmask 1046534
      %v798 = vsel %vm797, %v784, %v796
      %vm799 = vcmask 1047559
      %v800 = vsel %vm799, %v784, %v798
      %v801 = vsel %vm789, %v788, %v788
      %v802 = vsel %vm791, %v788, %v801
      %v803 = vsel %vm793, %v788, %v802
      %v804 = vsel %vm795, %v788, %v803
      %v805 = vsel %vm797, %v788, %v804
      %v806 = vsel %vm799, %v788, %v805
      %v809 = vmul.f32 %v689, %v800
      %v810 = vmul.f32 %v762, %v806
      %v811 = vsel %vm232, %v809, 0.0
      %812 = vadd.xlane.f32.xlu0 %v811
      %v813 = vpop.xlane.xlu0 %812
      %v814 = vsel %vm232, %v810, 0.0
      %815 = vadd.xlane.f32.xlu0 %v814
      %v816 = vpop.xlane.xlu0 %815
      %v817 = vmul.f32 %v813, %v813
      %v818 = vmul.f32 %v816, %v816
      %v821 = vlaneseq
      %v822 = vshrl.u32 %v821, 7
      %v823 = vsub.s32 %v297, %v822
      %v824 = vrot.slane %v817, %v823
      %v825 = vlaneseq
      %v826 = vshrl.u32 %v825, 7
      %v827 = vsub.s32 %v297, %v826
      %v828 = vrot.slane %v818, %v827
      %v829 = vsel %vm281, %v828, %v824
      %v831 = vsel %vm284, %v829, 0.0
      %832 = vadd.xlane.f32.xlu0 %v831
      %v833 = vpop.xlane.xlu0 %832
      %v834 = vrsqrt.pop %v833
      %v835 = vmul.f32 %v833, %v834
      %vm836 = vcmp.eq.f32.partialorder %v833, inf
      %v837 = vsel %vm836, %v833, %v835
      %vm838 = vcmp.eq.f32.partialorder %v833, 0.0
      %v839 = vand.u32 %v833, 2147483648
      %v840 = vsel %vm838, %v839, %v837
      %v841 = vmax.f32 %v840, 1e-30
      %v843 = vlaneseq
      %v844 = vshrl.u32 %v843, 7
      %v845 = vsub.s32 0, %v844
      %v846 = vrot.slane %v841, %v845
      %v847 = vlaneseq
      %v848 = vshrl.u32 %v847, 7
      %v849 = vsub.s32 1, %v848
      %v850 = vrot.slane %v841, %v849
      %v853 = vrcp.pop %v846
      %v854 = vmul.f32 %v813, %v853
      %v855 = vrcp.pop %v850
      %v856 = vmul.f32 %v816, %v855
    $region14: #{tpu_custom_call.1} parent=1 // loop_footer
      %s770 = sadd.s32 1, %s766
    $region15: #{tpu_custom_call.1} parent=1 // loop_footer_branch
      %765 = sbr.rel target = $region11
    $region16: #{tpu_custom_call.1} parent=1 // loop_exit
      _
    loop: start=0, step=1, limit=4
    $region17: #{tpu_custom_call.1} parent=1 // loop_pre_header
      _
    $region18: #{tpu_custom_call.1} parent=1 // loop_header
      %s858 = sphi 0, %s862
      %p859 = scmp.ge.s32.totalorder %s858, 4
      %v863 = vphi %v771, %v946
      %v864 = vphi %v772, %v948
    $region19: #{tpu_custom_call.1} parent=1 // loop_header_branch
      %861 = sbr.rel (%p859) target = $region23
    $region20: #{tpu_custom_call.1} parent=1 // loop_body
      %867 = vset.pattern.permute.xlu0 0
      %868 = vperm.xlu0 %867, %v863
      %v869 = vpop.permute.xlu0 %868
      %870 = vset.pattern.permute.xlu0 0
      %871 = vperm.xlu0 %870, %v864
      %v872 = vpop.permute.xlu0 %871
      %v873 = vlaneseq
      %v874 = vshrl.u32 %v873, 7
      %v875 = vsub.s32 %v297, %v874
      %v876 = vrot.slane %v869, %v875
      %v877 = vlaneseq
      %v878 = vshrl.u32 %v877, 7
      %v879 = vsub.s32 %v297, %v878
      %v880 = vrot.slane %v872, %v879
      %vm881 = vcmask 1042434
      %v882 = vsel %vm881, %v876, %v876
      %vm883 = vcmask 1043459
      %v884 = vsel %vm883, %v876, %v882
      %vm885 = vcmask 1044484
      %v886 = vsel %vm885, %v876, %v884
      %vm887 = vcmask 1045509
      %v888 = vsel %vm887, %v876, %v886
      %vm889 = vcmask 1046534
      %v890 = vsel %vm889, %v876, %v888
      %vm891 = vcmask 1047559
      %v892 = vsel %vm891, %v876, %v890
      %v893 = vsel %vm881, %v880, %v880
      %v894 = vsel %vm883, %v880, %v893
      %v895 = vsel %vm885, %v880, %v894
      %v896 = vsel %vm887, %v880, %v895
      %v897 = vsel %vm889, %v880, %v896
      %v898 = vsel %vm891, %v880, %v897
      %v901 = vmul.f32 %v324, %v892
      %v902 = vmul.f32 %v326, %v898
      %v903 = vsel %vm232, %v901, 0.0
      %904 = vadd.xlane.f32.xlu0 %v903
      %v905 = vpop.xlane.xlu0 %904
      %v906 = vsel %vm232, %v902, 0.0
      %907 = vadd.xlane.f32.xlu0 %v906
      %v908 = vpop.xlane.xlu0 %907
      %v909 = vmul.f32 %v905, %v905
      %v910 = vmul.f32 %v908, %v908
      %v913 = vlaneseq
      %v914 = vshrl.u32 %v913, 7
      %v915 = vsub.s32 %v297, %v914
      %v916 = vrot.slane %v909, %v915
      %v917 = vlaneseq
      %v918 = vshrl.u32 %v917, 7
      %v919 = vsub.s32 %v297, %v918
      %v920 = vrot.slane %v910, %v919
      %v921 = vsel %vm281, %v920, %v916
      %v923 = vsel %vm284, %v921, 0.0
      %924 = vadd.xlane.f32.xlu0 %v923
      %v925 = vpop.xlane.xlu0 %924
      %v926 = vrsqrt.pop %v925
      %v927 = vmul.f32 %v925, %v926
      %vm928 = vcmp.eq.f32.partialorder %v925, inf
      %v929 = vsel %vm928, %v925, %v927
      %vm930 = vcmp.eq.f32.partialorder %v925, 0.0
      %v931 = vand.u32 %v925, 2147483648
      %v932 = vsel %vm930, %v931, %v929
      %v933 = vmax.f32 %v932, 1e-30
      %v935 = vlaneseq
      %v936 = vshrl.u32 %v935, 7
      %v937 = vsub.s32 0, %v936
      %v938 = vrot.slane %v933, %v937
      %v939 = vlaneseq
      %v940 = vshrl.u32 %v939, 7
      %v941 = vsub.s32 1, %v940
      %v942 = vrot.slane %v933, %v941
      %v945 = vrcp.pop %v938
      %v946 = vmul.f32 %v905, %v945
      %v947 = vrcp.pop %v942
      %v948 = vmul.f32 %v908, %v947
    $region21: #{tpu_custom_call.1} parent=1 // loop_footer
      %s862 = sadd.s32 1, %s858
    $region22: #{tpu_custom_call.1} parent=1 // loop_footer_branch
      %857 = sbr.rel target = $region18
    $region23: #{tpu_custom_call.1} parent=1 // loop_exit
      _
    %951 = vset.pattern.permute.xlu0 0
    %952 = vperm.xlu0 %951, %v863
    %v953 = vpop.permute.xlu0 %952
    %954 = vset.pattern.permute.xlu0 0
    %955 = vperm.xlu0 %954, %v864
    %v956 = vpop.permute.xlu0 %955
    %v957 = vlaneseq
    %v958 = vshrl.u32 %v957, 7
    %v959 = vsub.s32 %v297, %v958
    %v960 = vrot.slane %v953, %v959
    %v961 = vlaneseq
    %v962 = vshrl.u32 %v961, 7
    %v963 = vsub.s32 %v297, %v962
    %v964 = vrot.slane %v956, %v963
    %vm965 = vcmask 1042434
    %v966 = vsel %vm965, %v960, %v960
    %vm967 = vcmask 1043459
    %v968 = vsel %vm967, %v960, %v966
    %vm969 = vcmask 1044484
    %v970 = vsel %vm969, %v960, %v968
    %vm971 = vcmask 1045509
    %v972 = vsel %vm971, %v960, %v970
    %vm973 = vcmask 1046534
    %v974 = vsel %vm973, %v960, %v972
    %vm975 = vcmask 1047559
    %v976 = vsel %vm975, %v960, %v974
    %v977 = vsel %vm965, %v964, %v964
    %v978 = vsel %vm967, %v964, %v977
    %v979 = vsel %vm969, %v964, %v978
    %v980 = vsel %vm971, %v964, %v979
    %v981 = vsel %vm973, %v964, %v980
    %v982 = vsel %vm975, %v964, %v981
    %v985 = vmul.f32 %v324, %v976
    %v986 = vmul.f32 %v326, %v982
    %v987 = vsel %vm232, %v985, 0.0
    %988 = vadd.xlane.f32.xlu0 %v987
    %v989 = vpop.xlane.xlu0 %988
    %v990 = vsel %vm232, %v986, 0.0
    %991 = vadd.xlane.f32.xlu0 %v990
    %v992 = vpop.xlane.xlu0 %991
    %v993 = vmul.f32 %v863, %v989
    %v994 = vmul.f32 %v864, %v992
    %997 = vset.pattern.permute.xlu0 0
    %998 = vperm.xlu0 %997, %v993
    %v999 = vpop.permute.xlu0 %998
    %1000 = vset.pattern.permute.xlu0 0
    %1001 = vperm.xlu0 %1000, %v994
    %v1002 = vpop.permute.xlu0 %1001
    %v1003 = vlaneseq
    %v1004 = vshrl.u32 %v1003, 7
    %v1005 = vsub.s32 %v297, %v1004
    %v1006 = vrot.slane %v999, %v1005
    %v1007 = vlaneseq
    %v1008 = vshrl.u32 %v1007, 7
    %v1009 = vsub.s32 %v297, %v1008
    %v1010 = vrot.slane %v1002, %v1009
    %v1011 = vsel %vm281, %v1010, %v1006
    %v1013 = vsel %vm284, %v1011, 0.0
    %1014 = vadd.xlane.f32.xlu0 %v1013
    %v1015 = vpop.xlane.xlu0 %1014
    %v1016 = vmul.f32 %v863, %v863
    %v1017 = vmul.f32 %v864, %v864
    %1020 = vset.pattern.permute.xlu0 0
    %1021 = vperm.xlu0 %1020, %v1016
    %v1022 = vpop.permute.xlu0 %1021
    %1023 = vset.pattern.permute.xlu0 0
    %1024 = vperm.xlu0 %1023, %v1017
    %v1025 = vpop.permute.xlu0 %1024
    %v1026 = vlaneseq
    %v1027 = vshrl.u32 %v1026, 7
    %v1028 = vsub.s32 %v297, %v1027
    %v1029 = vrot.slane %v1022, %v1028
    %v1030 = vlaneseq
    %v1031 = vshrl.u32 %v1030, 7
    %v1032 = vsub.s32 %v297, %v1031
    %v1033 = vrot.slane %v1025, %v1032
    %v1034 = vsel %vm281, %v1033, %v1029
    %v1036 = vsel %vm284, %v1034, 0.0
    %1037 = vadd.xlane.f32.xlu0 %v1036
    %v1038 = vpop.xlane.xlu0 %1037
    %v1039 = vmax.f32 %v1038, 1e-30
    %v1040 = vrcp.pop %v1039
    %v1041 = vmul.f32 %v1015, %v1040
    %v1042 = vmax.f32 %v1041, 0.0
    %v1043 = vmul.f32 %v311, %v1042
    %vm1044 = vcmask 1024
    %1045 = vst.msk [vmem:[%s4] sm:$0x3] %vm1044, %v1043
    // Predicated region
    $region24: #{tpu_custom_call.1} parent=1 // pred_check
      _
    $region25: #{tpu_custom_call.1} parent=1 // pred_check_branch
      %1047 = sbr.rel (0) target = $region27
    $region26: #{tpu_custom_call.1} parent=1 // pred_region
      %s1049 = ssub.s32 256, 256
      %1050 = vsyncadd [#allocation3], %s1049
      %s1051 = sshll.u32 [#allocation2], 4
      %s1052 = int_to_ptr.vmem [resolvable:$true] %s1051
      %1057 = dma.vmem_to_hbm [thread:$0]  %s1052, 256, %s2, [#allocation3], 128, 128, 8
    $region27: #{tpu_custom_call.1} parent=1 // pred_fallthru
      _
    // Predicated region
    $region28: #{tpu_custom_call.1} parent=1 // pred_check
      _
    $region29: #{tpu_custom_call.1} parent=1 // pred_check_branch
      %1059 = sbr.rel (0) target = $region31
    $region30: #{tpu_custom_call.1} parent=1 // pred_region
      %s1061 = ssub.s32 32, 32
      %1062 = vsyncadd [#allocation5], %s1061
      %s1064 = sshll.u32 [#allocation4], 4
      %s1065 = int_to_ptr.vmem [resolvable:$true] %s1064
      %1067 = dma.vmem_to_hbm [thread:$0]  %s1065, 32, %s3, [#allocation5]
    $region31: #{tpu_custom_call.1} parent=1 // pred_fallthru
      _
    // Predicated region
    $region32: #{tpu_custom_call.1} parent=1 // pred_check
      _
    $region33: #{tpu_custom_call.1} parent=1 // pred_check_branch
      %1069 = sbr.rel (0) target = $region35
    $region34: #{tpu_custom_call.1} parent=1 // pred_region
      _
    $region35: #{tpu_custom_call.1} parent=1 // pred_fallthru
      _
    // Predicated region
    $region36: #{tpu_custom_call.1} parent=1 // pred_check
      _
    $region37: #{tpu_custom_call.1} parent=1 // pred_check_branch
      %1071 = sbr.rel (0) target = $region39
    $region38: #{tpu_custom_call.1} parent=1 // pred_region
      %1072 = dma.done [#allocation3], 256
    $region39: #{tpu_custom_call.1} parent=1 // pred_fallthru
      _
    // Predicated region
    $region40: #{tpu_custom_call.1} parent=1 // pred_check
      _
    $region41: #{tpu_custom_call.1} parent=1 // pred_check_branch
      %1074 = sbr.rel (0) target = $region43
    $region42: #{tpu_custom_call.1} parent=1 // pred_region
      %1075 = dma.done [#allocation5], 32
    $region43: #{tpu_custom_call.1} parent=1 // pred_fallthru
      _
    // Predicated region
    $region44: #{tpu_custom_call.1} parent=1 // pred_check
      _
    $region45: #{tpu_custom_call.1} parent=1 // pred_check_branch
      %1077 = sbr.rel (0) target = $region47
    $region46: #{tpu_custom_call.1} parent=1 // pred_region
      _
    $region47: #{tpu_custom_call.1} parent=1 // pred_fallthru
      _
    %1078 = vsyncpa [#allocation3], 1
    %1079 = vsyncpa [#allocation5], 1

</llo_original>
